<compile_context>
chip_gen: v7x
topology: tpu7x:2x2x1
jax: 0.10.0
libtpu: 0.0.40
codegen_flags: <defaults>
</compile_context>

<pallas_src>
import jax
import jax.numpy as jnp
from jax import lax
from jax.experimental import pallas as pl
from jax.experimental.pallas import tpu as pltpu


def _elu(y):
    """ELU(alpha=1) in f32. exp runs on the EUP; min() keeps the dead branch finite."""
    return jnp.where(y > 0.0, y, jnp.exp(jnp.minimum(y, 0.0)) - 1.0)


def dan_model_kernel(ids_ref, invlen_ref, emb_ref, *refs):
    """Fused DanModel forward (eval mode). No grid: runs once, everything VMEM-resident.

    refs = (w_0, s_0, ..., w_{L-1}, s_{L-1}, w_cls, s_cls, o_ref)
      w_i   : (in_dim_i, H)  bf16  Linear weight (pre-transposed) with BN scale folded
      s_i   : (1, H)         f32   Linear bias + BN shift, folded
      w_cls : (H, C_pad)     bf16  classifier weight, BN folded, zero-padded to 128 lanes
      s_cls : (1, C_pad)     f32
    """
    o_ref = refs[-1]
    wrefs = refs[:-1]
    n_layers = (len(wrefs) - 2) // 2

    B, S = ids_ref.shape
    V, _ = emb_ref.shape

    # --- Embedding lookup + 'avg' pooling ---------------------------------
    # counts[b, v] = #occurrences of token v in row b, built with 2-D ops only,
    # then counts @ emb == sum_t emb[ids[b, t]] on the MXU (bf16, f32 accumulate).
    ids = ids_ref[...]                                          # (B, S) int32
    iota_v = lax.broadcasted_iota(jnp.int32, (B, V), 1)         # (B, V)
    counts = jnp.zeros((B, V), jnp.float32)
    for s in range(S):                                          # static, small S
        counts = counts + (ids[:, s:s + 1] == iota_v).astype(jnp.float32)
    pooled = jnp.dot(counts.astype(jnp.bfloat16), emb_ref[...],
                     preferred_element_type=jnp.float32)        # (B, E_pad) f32
    x = pooled * invlen_ref[...]                                # multiply by 1/text_len
    # Dropout after pooling: identity in eval mode.

    # --- Encoder: L x [Linear + folded BatchNorm1d(eval) + ELU + Dropout(id)] ---
    for i in range(n_layers):
        w = wrefs[2 * i][...]                                   # bf16
        s = wrefs[2 * i + 1][...]                               # f32
        y = jnp.dot(x.astype(jnp.bfloat16), w,
                    preferred_element_type=jnp.float32) + s
        x = _elu(y)

    # --- Classifier: Linear + folded BatchNorm1d(eval) + Dropout(id) ---
    wc = wrefs[2 * n_layers][...]
    sc = wrefs[2 * n_layers + 1][...]
    logits = jnp.dot(x.astype(jnp.bfloat16), wc,
                     preferred_element_type=jnp.float32) + sc
    o_ref[...] = logits.astype(o_ref.dtype)                     # lane-dense (B, C_pad) store


def dan_model_forward(ids, lengths, params):
    """Single fused pallas_call (no grid, all operands VMEM-resident)."""
    B, S = ids.shape
    enc = params["encoder"]
    wc, sc = params["classifier"]
    c_pad = wc.shape[1]

    # Pad batch to a multiple of 16 (bf16 sublane tile). Padded rows use length 1
    # (any nonzero value; they are sliced off before returning).
    B_pad = max(16, ((B + 15) // 16) * 16)
    pad = B_pad - B
    ids_p = jnp.pad(ids.astype(jnp.int32), ((0, pad), (0, 0)))
    len_p = jnp.pad(lengths.astype(jnp.float32), (0, pad), constant_values=1.0)
    inv_len = (1.0 / len_p).reshape(B_pad, 1)

    ins = [ids_p, inv_len, params["emb"]]
    for (w, s) in enc:
        ins += [w, s]
    ins += [wc, sc]

    total_bytes = sum(int(a.size) * a.dtype.itemsize for a in ins) + B_pad * c_pad * 4
    vmem_limit = int(max(8 * 1024 * 1024, 4 * total_bytes))

    vmem_spec = pl.BlockSpec(memory_space=pltpu.MemorySpace.VMEM)
    out_padded = pl.pallas_call(
        dan_model_kernel,
        out_shape=jax.ShapeDtypeStruct((B_pad, c_pad), jnp.float32),
        in_specs=[pl.BlockSpec(memory_space=pltpu.MemorySpace.VMEM)] * len(ins),
        out_specs=vmem_spec,
        compiler_params=pltpu.CompilerParams(vmem_limit_bytes=vmem_limit),
    )(*ins)

    return out_padded[:B, : params["n_classes"]]


def _fold_linear_bn(key, in_dim, out_dim, eps=1e-5):
    """Synthetic Linear + BatchNorm1d(eval) params, folded into (W'^T, shift')."""
    kw, kb, kg, kbe, km, kv = jax.random.split(key, 6)
    bound = float(1.0 / (in_dim ** 0.5))
    w = jax.random.uniform(kw, (out_dim, in_dim), minval=-bound, maxval=bound,
                           dtype=jnp.float32)
    b = jax.random.uniform(kb, (out_dim,), minval=-bound, maxval=bound,
                           dtype=jnp.float32)
    gamma = 1.0 + 0.1 * jax.random.normal(kg, (out_dim,), jnp.float32)
    beta = 0.1 * jax.random.normal(kbe, (out_dim,), jnp.float32)
    mean = 0.1 * jax.random.normal(km, (out_dim,), jnp.float32)
    var = 1.0 + 0.5 * jax.random.uniform(kv, (out_dim,), dtype=jnp.float32)

    scale = gamma / jnp.sqrt(var + eps)
    w_folded = w.T * scale[None, :]                       # (in_dim, out_dim) f32
    shift = (b - mean) * scale + beta                     # (out_dim,)
    raw = dict(w=w, b=b, gamma=gamma, beta=beta, mean=mean, var=var, eps=eps)
    return w_folded, shift.reshape(1, -1), raw


def init_dan_model_params(key, vocab_size, emb_dim, n_hidden_layers,
                          n_hidden_units, n_classes, lane=128):
    e_pad = max(lane, ((emb_dim + lane - 1) // lane) * lane)
    c_pad = max(lane, ((n_classes + lane - 1) // lane) * lane)

    key, k_emb = jax.random.split(key)
    emb_raw = 0.1 * jax.random.normal(k_emb, (vocab_size, emb_dim), jnp.float32)
    emb_p = (jnp.zeros((vocab_size, e_pad), jnp.float32)
             .at[:, :emb_dim].set(emb_raw).astype(jnp.bfloat16))

    encoder, encoder_raw = [], []
    for i in range(n_hidden_layers):
        in_dim = emb_dim if i == 0 else n_hidden_units
        key, k_layer = jax.random.split(key)
        w_f, s_f, raw = _fold_linear_bn(k_layer, in_dim, n_hidden_units)
        if i == 0:  # zero-pad rows to the padded embedding dim (exact, adds zeros)
            w_f = jnp.zeros((e_pad, n_hidden_units), jnp.float32).at[:in_dim, :].set(w_f)
        encoder.append((w_f.astype(jnp.bfloat16), s_f))
        encoder_raw.append(raw)

    key, k_cls = jax.random.split(key)
    wc_f, sc_f, cls_raw = _fold_linear_bn(k_cls, n_hidden_units, n_classes)
    wc_p = (jnp.zeros((n_hidden_units, c_pad), jnp.float32)
            .at[:, :n_classes].set(wc_f).astype(jnp.bfloat16))
    sc_p = jnp.zeros((1, c_pad), jnp.float32).at[:, :n_classes].set(sc_f)

    return dict(emb=emb_p, emb_raw=emb_raw,
                encoder=encoder, encoder_raw=encoder_raw,
                classifier=(wc_p, sc_p), classifier_raw=cls_raw,
                n_classes=n_classes)


def dan_model_reference_f32(ids, lengths, params):
    """Pure-JAX f32 reference with the *unfolded* Linear/BatchNorm(eval) math."""
    emb = jnp.take(params["emb_raw"], ids, axis=0)                 # (B, S, E)
    x = emb.sum(axis=1) / lengths.astype(jnp.float32)[:, None]     # avg pooling
    for raw in params["encoder_raw"]:
        y = x @ raw["w"].T + raw["b"]
        y = (y - raw["mean"]) / jnp.sqrt(raw["var"] + raw["eps"]) * raw["gamma"] + raw["beta"]
        x = jnp.where(y > 0, y, jnp.expm1(y))                      # ELU
    raw = params["classifier_raw"]
    y = x @ raw["w"].T + raw["b"]
    y = (y - raw["mean"]) / jnp.sqrt(raw["var"] + raw["eps"]) * raw["gamma"] + raw["beta"]
    return y


def dan_model_reference_bf16(ids, lengths, params):
    """Mirrors the kernel numerics: folded bf16 weights, bf16 matmul inputs, f32 accum."""
    def bf(a):
        return a.astype(jnp.bfloat16).astype(jnp.float32)

    emb = jnp.take(params["emb"].astype(jnp.float32), ids, axis=0)  # (B, S, E_pad)
    inv_len = 1.0 / lengths.astype(jnp.float32)[:, None]
    x = emb.sum(axis=1) * inv_len
    for (w, s) in params["encoder"]:
        y = bf(x) @ w.astype(jnp.float32) + s
        x = jnp.where(y > 0.0, y, jnp.exp(jnp.minimum(y, 0.0)) - 1.0)
    wc, sc = params["classifier"]
    y = bf(x) @ wc.astype(jnp.float32) + sc
    return y[:, : params["n_classes"]]


if __name__ == "__main__":
    # Small, forward-consistent shapes.
    batch, seq = 8, 16
    vocab_size = 128
    emb_dim = 64
    n_hidden_layers = 2
    n_hidden_units = 128
    n_classes = 16
    nn_dropout = 0.265       # identity in eval mode

    key = jax.random.PRNGKey(0)
    k_ids, k_len, k_par = jax.random.split(key, 3)
    ids = jax.random.randint(k_ids, (batch, seq), 0, vocab_size, dtype=jnp.int32)
    lengths = jax.random.randint(k_len, (batch,), 1, seq + 1, dtype=jnp.int32)

    params = init_dan_model_params(k_par, vocab_size, emb_dim, n_hidden_layers,
                                   n_hidden_units, n_classes)

    out = dan_model_forward(ids, lengths, params)
    out = jax.block_until_ready(out)
    assert out.shape == (batch, n_classes), out.shape

    # Tight check against a reference that reproduces the kernel's bf16 numerics.
    ref_bf16 = dan_model_reference_bf16(ids, lengths, params)
    err_tight = float(jnp.max(jnp.abs(out - ref_bf16)))
    assert bool(jnp.allclose(out, ref_bf16, atol=2e-3, rtol=2e-3)), err_tight

    # Looser sanity check against the unfolded f32 Linear+BatchNorm(eval)+ELU path
    # (difference = bf16 quantization of folded weights/activations only).
    ref_f32 = dan_model_reference_f32(ids, lengths, params)
    err_loose = float(jnp.max(jnp.abs(out - ref_f32)))
    assert bool(jnp.allclose(out, ref_f32, atol=6e-2, rtol=6e-2)), err_loose

    print("KERNEL_OK")
</pallas_src>

<mosaic_0001>
module attributes {stable_mosaic.version = 11 : i64} {
  func.func @dan_model_kernel(%arg0: memref<16x16xi32, #tpu.memory_space<vmem>>, %arg1: memref<16x1xf32, #tpu.memory_space<vmem>>, %arg2: memref<128x128xbf16, #tpu.memory_space<vmem>>, %arg3: memref<128x128xbf16, #tpu.memory_space<vmem>>, %arg4: memref<1x128xf32, #tpu.memory_space<vmem>>, %arg5: memref<128x128xbf16, #tpu.memory_space<vmem>>, %arg6: memref<1x128xf32, #tpu.memory_space<vmem>>, %arg7: memref<128x128xbf16, #tpu.memory_space<vmem>>, %arg8: memref<1x128xf32, #tpu.memory_space<vmem>>, %arg9: memref<16x128xf32, #tpu.memory_space<vmem>>) attributes {dimension_semantics = [], scalar_prefetch = 0 : i64, scratch_operands = 0 : i64, tpu.core_type = #tpu.core_type<tc>} {
    %c0 = arith.constant 0 : index
    %c0_0 = arith.constant 0 : index
    %0 = vector.load %arg0[%c0, %c0_0] : memref<16x16xi32, #tpu.memory_space<vmem>>, vector<16x16xi32>
    %1 = tpu.iota {dimensions = array<i32: 1>} : vector<16x128xi32>
    %cst = arith.constant 0.000000e+00 : f32
    %2 = vector.broadcast %cst : f32 to vector<16x128xf32>
    %3 = vector.extract_strided_slice %0 {offsets = [0, 0], sizes = [16, 1], strides = [1, 1]} : vector<16x16xi32> to vector<16x1xi32>
    %4 = vector.broadcast %3 : vector<16x1xi32> to vector<16x128xi32>
    %5 = arith.cmpi eq, %4, %1 : vector<16x128xi32>
    %6 = arith.extui %5 : vector<16x128xi1> to vector<16x128xi32>
    %7 = arith.sitofp %6 : vector<16x128xi32> to vector<16x128xf32>
    %8 = arith.addf %2, %7 : vector<16x128xf32>
    %9 = vector.extract_strided_slice %0 {offsets = [0, 1], sizes = [16, 1], strides = [1, 1]} : vector<16x16xi32> to vector<16x1xi32>
    %10 = vector.broadcast %9 : vector<16x1xi32> to vector<16x128xi32>
    %11 = arith.cmpi eq, %10, %1 : vector<16x128xi32>
    %12 = arith.extui %11 : vector<16x128xi1> to vector<16x128xi32>
    %13 = arith.sitofp %12 : vector<16x128xi32> to vector<16x128xf32>
    %14 = arith.addf %8, %13 : vector<16x128xf32>
    %15 = vector.extract_strided_slice %0 {offsets = [0, 2], sizes = [16, 1], strides = [1, 1]} : vector<16x16xi32> to vector<16x1xi32>
    %16 = vector.broadcast %15 : vector<16x1xi32> to vector<16x128xi32>
    %17 = arith.cmpi eq, %16, %1 : vector<16x128xi32>
    %18 = arith.extui %17 : vector<16x128xi1> to vector<16x128xi32>
    %19 = arith.sitofp %18 : vector<16x128xi32> to vector<16x128xf32>
    %20 = arith.addf %14, %19 : vector<16x128xf32>
    %21 = vector.extract_strided_slice %0 {offsets = [0, 3], sizes = [16, 1], strides = [1, 1]} : vector<16x16xi32> to vector<16x1xi32>
    %22 = vector.broadcast %21 : vector<16x1xi32> to vector<16x128xi32>
    %23 = arith.cmpi eq, %22, %1 : vector<16x128xi32>
    %24 = arith.extui %23 : vector<16x128xi1> to vector<16x128xi32>
    %25 = arith.sitofp %24 : vector<16x128xi32> to vector<16x128xf32>
    %26 = arith.addf %20, %25 : vector<16x128xf32>
    %27 = vector.extract_strided_slice %0 {offsets = [0, 4], sizes = [16, 1], strides = [1, 1]} : vector<16x16xi32> to vector<16x1xi32>
    %28 = vector.broadcast %27 : vector<16x1xi32> to vector<16x128xi32>
    %29 = arith.cmpi eq, %28, %1 : vector<16x128xi32>
    %30 = arith.extui %29 : vector<16x128xi1> to vector<16x128xi32>
    %31 = arith.sitofp %30 : vector<16x128xi32> to vector<16x128xf32>
    %32 = arith.addf %26, %31 : vector<16x128xf32>
    %33 = vector.extract_strided_slice %0 {offsets = [0, 5], sizes = [16, 1], strides = [1, 1]} : vector<16x16xi32> to vector<16x1xi32>
    %34 = vector.broadcast %33 : vector<16x1xi32> to vector<16x128xi32>
    %35 = arith.cmpi eq, %34, %1 : vector<16x128xi32>
    %36 = arith.extui %35 : vector<16x128xi1> to vector<16x128xi32>
    %37 = arith.sitofp %36 : vector<16x128xi32> to vector<16x128xf32>
    %38 = arith.addf %32, %37 : vector<16x128xf32>
    %39 = vector.extract_strided_slice %0 {offsets = [0, 6], sizes = [16, 1], strides = [1, 1]} : vector<16x16xi32> to vector<16x1xi32>
    %40 = vector.broadcast %39 : vector<16x1xi32> to vector<16x128xi32>
    %41 = arith.cmpi eq, %40, %1 : vector<16x128xi32>
    %42 = arith.extui %41 : vector<16x128xi1> to vector<16x128xi32>
    %43 = arith.sitofp %42 : vector<16x128xi32> to vector<16x128xf32>
    %44 = arith.addf %38, %43 : vector<16x128xf32>
    %45 = vector.extract_strided_slice %0 {offsets = [0, 7], sizes = [16, 1], strides = [1, 1]} : vector<16x16xi32> to vector<16x1xi32>
    %46 = vector.broadcast %45 : vector<16x1xi32> to vector<16x128xi32>
    %47 = arith.cmpi eq, %46, %1 : vector<16x128xi32>
    %48 = arith.extui %47 : vector<16x128xi1> to vector<16x128xi32>
    %49 = arith.sitofp %48 : vector<16x128xi32> to vector<16x128xf32>
    %50 = arith.addf %44, %49 : vector<16x128xf32>
    %51 = vector.extract_strided_slice %0 {offsets = [0, 8], sizes = [16, 1], strides = [1, 1]} : vector<16x16xi32> to vector<16x1xi32>
    %52 = vector.broadcast %51 : vector<16x1xi32> to vector<16x128xi32>
    %53 = arith.cmpi eq, %52, %1 : vector<16x128xi32>
    %54 = arith.extui %53 : vector<16x128xi1> to vector<16x128xi32>
    %55 = arith.sitofp %54 : vector<16x128xi32> to vector<16x128xf32>
    %56 = arith.addf %50, %55 : vector<16x128xf32>
    %57 = vector.extract_strided_slice %0 {offsets = [0, 9], sizes = [16, 1], strides = [1, 1]} : vector<16x16xi32> to vector<16x1xi32>
    %58 = vector.broadcast %57 : vector<16x1xi32> to vector<16x128xi32>
    %59 = arith.cmpi eq, %58, %1 : vector<16x128xi32>
    %60 = arith.extui %59 : vector<16x128xi1> to vector<16x128xi32>
    %61 = arith.sitofp %60 : vector<16x128xi32> to vector<16x128xf32>
    %62 = arith.addf %56, %61 : vector<16x128xf32>
    %63 = vector.extract_strided_slice %0 {offsets = [0, 10], sizes = [16, 1], strides = [1, 1]} : vector<16x16xi32> to vector<16x1xi32>
    %64 = vector.broadcast %63 : vector<16x1xi32> to vector<16x128xi32>
    %65 = arith.cmpi eq, %64, %1 : vector<16x128xi32>
    %66 = arith.extui %65 : vector<16x128xi1> to vector<16x128xi32>
    %67 = arith.sitofp %66 : vector<16x128xi32> to vector<16x128xf32>
    %68 = arith.addf %62, %67 : vector<16x128xf32>
    %69 = vector.extract_strided_slice %0 {offsets = [0, 11], sizes = [16, 1], strides = [1, 1]} : vector<16x16xi32> to vector<16x1xi32>
    %70 = vector.broadcast %69 : vector<16x1xi32> to vector<16x128xi32>
    %71 = arith.cmpi eq, %70, %1 : vector<16x128xi32>
    %72 = arith.extui %71 : vector<16x128xi1> to vector<16x128xi32>
    %73 = arith.sitofp %72 : vector<16x128xi32> to vector<16x128xf32>
    %74 = arith.addf %68, %73 : vector<16x128xf32>
    %75 = vector.extract_strided_slice %0 {offsets = [0, 12], sizes = [16, 1], strides = [1, 1]} : vector<16x16xi32> to vector<16x1xi32>
    %76 = vector.broadcast %75 : vector<16x1xi32> to vector<16x128xi32>
    %77 = arith.cmpi eq, %76, %1 : vector<16x128xi32>
    %78 = arith.extui %77 : vector<16x128xi1> to vector<16x128xi32>
    %79 = arith.sitofp %78 : vector<16x128xi32> to vector<16x128xf32>
    %80 = arith.addf %74, %79 : vector<16x128xf32>
    %81 = vector.extract_strided_slice %0 {offsets = [0, 13], sizes = [16, 1], strides = [1, 1]} : vector<16x16xi32> to vector<16x1xi32>
    %82 = vector.broadcast %81 : vector<16x1xi32> to vector<16x128xi32>
    %83 = arith.cmpi eq, %82, %1 : vector<16x128xi32>
    %84 = arith.extui %83 : vector<16x128xi1> to vector<16x128xi32>
    %85 = arith.sitofp %84 : vector<16x128xi32> to vector<16x128xf32>
    %86 = arith.addf %80, %85 : vector<16x128xf32>
    %87 = vector.extract_strided_slice %0 {offsets = [0, 14], sizes = [16, 1], strides = [1, 1]} : vector<16x16xi32> to vector<16x1xi32>
    %88 = vector.broadcast %87 : vector<16x1xi32> to vector<16x128xi32>
    %89 = arith.cmpi eq, %88, %1 : vector<16x128xi32>
    %90 = arith.extui %89 : vector<16x128xi1> to vector<16x128xi32>
    %91 = arith.sitofp %90 : vector<16x128xi32> to vector<16x128xf32>
    %92 = arith.addf %86, %91 : vector<16x128xf32>
    %93 = vector.extract_strided_slice %0 {offsets = [0, 15], sizes = [16, 1], strides = [1, 1]} : vector<16x16xi32> to vector<16x1xi32>
    %94 = vector.broadcast %93 : vector<16x1xi32> to vector<16x128xi32>
    %95 = arith.cmpi eq, %94, %1 : vector<16x128xi32>
    %96 = arith.extui %95 : vector<16x128xi1> to vector<16x128xi32>
    %97 = arith.sitofp %96 : vector<16x128xi32> to vector<16x128xf32>
    %98 = arith.addf %92, %97 : vector<16x128xf32>
    %99 = arith.truncf %98 : vector<16x128xf32> to vector<16x128xbf16>
    %c0_1 = arith.constant 0 : index
    %c0_2 = arith.constant 0 : index
    %100 = vector.load %arg2[%c0_1, %c0_2] : memref<128x128xbf16, #tpu.memory_space<vmem>>, vector<128x128xbf16>
    %cst_3 = arith.constant dense<0.000000e+00> : vector<16x128xf32>
    %101 = tpu.matmul %99, %100, %cst_3 {dimension_numbers = #tpu.dot_dimension_numbers<[1], [0], [0], [1], [0, 0, 1, 1], [], []>} : vector<16x128xbf16>, vector<128x128xbf16>, vector<16x128xf32> -> vector<16x128xf32>
    %c0_4 = arith.constant 0 : index
    %c0_5 = arith.constant 0 : index
    %102 = vector.load %arg1[%c0_4, %c0_5] : memref<16x1xf32, #tpu.memory_space<vmem>>, vector<16x1xf32>
    %103 = vector.broadcast %102 : vector<16x1xf32> to vector<16x128xf32>
    %104 = arith.mulf %101, %103 : vector<16x128xf32>
    %c0_6 = arith.constant 0 : index
    %c0_7 = arith.constant 0 : index
    %105 = vector.load %arg3[%c0_6, %c0_7] : memref<128x128xbf16, #tpu.memory_space<vmem>>, vector<128x128xbf16>
    %c0_8 = arith.constant 0 : index
    %c0_9 = arith.constant 0 : index
    %106 = vector.load %arg4[%c0_8, %c0_9] : memref<1x128xf32, #tpu.memory_space<vmem>>, vector<1x128xf32>
    %107 = arith.truncf %104 : vector<16x128xf32> to vector<16x128xbf16>
    %cst_10 = arith.constant dense<0.000000e+00> : vector<16x128xf32>
    %108 = tpu.matmul %107, %105, %cst_10 {dimension_numbers = #tpu.dot_dimension_numbers<[1], [0], [0], [1], [0, 0, 1, 1], [], []>} : vector<16x128xbf16>, vector<128x128xbf16>, vector<16x128xf32> -> vector<16x128xf32>
    %109 = vector.broadcast %106 : vector<1x128xf32> to vector<16x128xf32>
    %110 = arith.addf %108, %109 : vector<16x128xf32>
    %cst_11 = arith.constant 0.000000e+00 : f32
    %111 = vector.broadcast %cst_11 : f32 to vector<16x128xf32>
    %112 = arith.cmpf ogt, %110, %111 : vector<16x128xf32>
    %cst_12 = arith.constant 0.000000e+00 : f32
    %113 = vector.broadcast %cst_12 : f32 to vector<16x128xf32>
    %114 = arith.minimumf %110, %113 : vector<16x128xf32>
    %115 = math.exp %114 : vector<16x128xf32>
    %cst_13 = arith.constant 1.000000e+00 : f32
    %116 = vector.broadcast %cst_13 : f32 to vector<16x128xf32>
    %117 = arith.subf %115, %116 : vector<16x128xf32>
    %118 = arith.select %112, %110, %117 : vector<16x128xi1>, vector<16x128xf32>
    %c0_14 = arith.constant 0 : index
    %c0_15 = arith.constant 0 : index
    %119 = vector.load %arg5[%c0_14, %c0_15] : memref<128x128xbf16, #tpu.memory_space<vmem>>, vector<128x128xbf16>
    %c0_16 = arith.constant 0 : index
    %c0_17 = arith.constant 0 : index
    %120 = vector.load %arg6[%c0_16, %c0_17] : memref<1x128xf32, #tpu.memory_space<vmem>>, vector<1x128xf32>
    %121 = arith.truncf %118 : vector<16x128xf32> to vector<16x128xbf16>
    %cst_18 = arith.constant dense<0.000000e+00> : vector<16x128xf32>
    %122 = tpu.matmul %121, %119, %cst_18 {dimension_numbers = #tpu.dot_dimension_numbers<[1], [0], [0], [1], [0, 0, 1, 1], [], []>} : vector<16x128xbf16>, vector<128x128xbf16>, vector<16x128xf32> -> vector<16x128xf32>
    %123 = vector.broadcast %120 : vector<1x128xf32> to vector<16x128xf32>
    %124 = arith.addf %122, %123 : vector<16x128xf32>
    %cst_19 = arith.constant 0.000000e+00 : f32
    %125 = vector.broadcast %cst_19 : f32 to vector<16x128xf32>
    %126 = arith.cmpf ogt, %124, %125 : vector<16x128xf32>
    %cst_20 = arith.constant 0.000000e+00 : f32
    %127 = vector.broadcast %cst_20 : f32 to vector<16x128xf32>
    %128 = arith.minimumf %124, %127 : vector<16x128xf32>
    %129 = math.exp %128 : vector<16x128xf32>
    %cst_21 = arith.constant 1.000000e+00 : f32
    %130 = vector.broadcast %cst_21 : f32 to vector<16x128xf32>
    %131 = arith.subf %129, %130 : vector<16x128xf32>
    %132 = arith.select %126, %124, %131 : vector<16x128xi1>, vector<16x128xf32>
    %c0_22 = arith.constant 0 : index
    %c0_23 = arith.constant 0 : index
    %133 = vector.load %arg7[%c0_22, %c0_23] : memref<128x128xbf16, #tpu.memory_space<vmem>>, vector<128x128xbf16>
    %c0_24 = arith.constant 0 : index
    %c0_25 = arith.constant 0 : index
    %134 = vector.load %arg8[%c0_24, %c0_25] : memref<1x128xf32, #tpu.memory_space<vmem>>, vector<1x128xf32>
    %135 = arith.truncf %132 : vector<16x128xf32> to vector<16x128xbf16>
    %cst_26 = arith.constant dense<0.000000e+00> : vector<16x128xf32>
    %136 = tpu.matmul %135, %133, %cst_26 {dimension_numbers = #tpu.dot_dimension_numbers<[1], [0], [0], [1], [0, 0, 1, 1], [], []>} : vector<16x128xbf16>, vector<128x128xbf16>, vector<16x128xf32> -> vector<16x128xf32>
    %137 = vector.broadcast %134 : vector<1x128xf32> to vector<16x128xf32>
    %138 = arith.addf %136, %137 : vector<16x128xf32>
    %c0_27 = arith.constant 0 : index
    %c0_28 = arith.constant 0 : index
    %139 = vector.load %arg9[%c0_27, %c0_28] : memref<16x128xf32, #tpu.memory_space<vmem>>, vector<16x128xf32>
    tpu.vector_store %arg9[%c0_27, %c0_28], %138 {strides = array<i32>} : memref<16x128xf32, #tpu.memory_space<vmem>>, vector<16x128xf32>,
    return
  }
}

</mosaic_0001>

<llo_original>
// kernel: tpu_custom_call.1
$region0: #{tpu_custom_call.1}
  #allocation0 [shape = 'u32[]', space=smem, size = 0x4, offset = 0x4, fixed_abs, tag = 'smem constant byte address 0x4 - core index']
  #allocation1 [shape = 'u32[144,128]{1,0:T(1,128)}', space=vmem, size = 0x12000, scoped, tag = 'internal scratch']
  %s0 = inlined_call_operand.vmem [shape: s32[16,16], index: 0, kind: input, shape index: {}]
  %s1 = inlined_call_operand.vmem [shape: f32[16,1], index: 1, kind: input, shape index: {}]
  %s2 = inlined_call_operand.hbm [shape: bf16[128,128], index: 2, kind: input, shape index: {}]
  %s3 = inlined_call_operand.hbm [shape: bf16[128,128], index: 3, kind: input, shape index: {}]
  %s4 = inlined_call_operand.vmem [shape: f32[1,128], index: 4, kind: input, shape index: {}]
  %s5 = inlined_call_operand.hbm [shape: bf16[128,128], index: 5, kind: input, shape index: {}]
  %s6 = inlined_call_operand.vmem [shape: f32[1,128], index: 6, kind: input, shape index: {}]
  %s7 = inlined_call_operand.hbm [shape: bf16[128,128], index: 7, kind: input, shape index: {}]
  %s8 = inlined_call_operand.vmem [shape: f32[1,128], index: 8, kind: input, shape index: {}]
  %s9 = inlined_call_operand.hbm [shape: f32[16,128], index: 9, kind: output, shape index: {}]
  %s10 = sld [smem:[#allocation0]]
  $region62: #{tpu_custom_call.1} parent=0
    _
  %s12 = ssub.s32 1, %s10
  %s13 = scalar_select 0, %s12, %s10
  $region1: #{tpu_custom_call.1} parent=0
    #allocation2 [shape = 'u8[32768]{0}', space=vmem, size = 0x8000, scoped, tag = 'input window, operand 2, single buffered']
    #allocation3 [shape = 's32[1]{0}', space=sflag, size = 0x4, scoped, tag = 'scoped memory for tpu_custom_call.1']
    #allocation4 [shape = 's32[1]{0}', space=sflag, size = 0x4, scoped, tag = 'scoped memory for tpu_custom_call.1']
    #allocation5 [shape = 'u8[32768]{0}', space=vmem, size = 0x8000, scoped, tag = 'input window, operand 3, single buffered']
    #allocation6 [shape = 's32[1]{0}', space=sflag, size = 0x4, scoped, tag = 'scoped memory for tpu_custom_call.1']
    #allocation7 [shape = 'u8[32768]{0}', space=vmem, size = 0x8000, scoped, tag = 'input window, operand 5, single buffered']
    #allocation8 [shape = 'u8[32768]{0}', space=vmem, size = 0x8000, scoped, tag = 'input window, operand 7, single buffered']
    #allocation9 [shape = 's32[1]{0}', space=sflag, size = 0x4, scoped, tag = 'scoped memory for tpu_custom_call.1']
    #allocation10 [shape = 'u8[8192]{0}', space=vmem, size = 0x2000, scoped, tag = 'output window, operand 0, single buffered']
    %14 = vsyncpa [#allocation3], 0
    %15 = vsyncpa [#allocation6], 0
    %16 = vsyncpa [#allocation9], 0
    %17 = vsyncpa [#allocation4], 0
    // Predicated region
    $region2: #{tpu_custom_call.1} parent=1 // pred_check
      _
    $region3: #{tpu_custom_call.1} parent=1 // pred_check_branch
      %19 = sbr.rel (0) target = $region5
    $region4: #{tpu_custom_call.1} parent=1 // pred_region
      _
    $region5: #{tpu_custom_call.1} parent=1 // pred_fallthru
      _
    // Predicated region
    $region6: #{tpu_custom_call.1} parent=1 // pred_check
      _
    $region7: #{tpu_custom_call.1} parent=1 // pred_check_branch
      %21 = sbr.rel (0) target = $region9
    $region8: #{tpu_custom_call.1} parent=1 // pred_region
      _
    $region9: #{tpu_custom_call.1} parent=1 // pred_fallthru
      _
    // Predicated region
    $region10: #{tpu_custom_call.1} parent=1 // pred_check
      _
    $region11: #{tpu_custom_call.1} parent=1 // pred_check_branch
      %23 = sbr.rel (0) target = $region13
    $region12: #{tpu_custom_call.1} parent=1 // pred_region
      %s25 = ssub.s32 1024, 1024
      %26 = vsyncadd [#allocation3], %s25
      %s27 = sshll.u32 [#allocation2], 4
      %s28 = int_to_ptr.vmem [resolvable:$true] %s27
      %33 = dma.hbm_to_vmem [thread:$0]  %s2, 1024, %s28, [#allocation3], 64, 64, 4
    $region13: #{tpu_custom_call.1} parent=1 // pred_fallthru
      _
    // Predicated region
    $region14: #{tpu_custom_call.1} parent=1 // pred_check
      _
    $region15: #{tpu_custom_call.1} parent=1 // pred_check_branch
      %35 = sbr.rel (0) target = $region17
    $region16: #{tpu_custom_call.1} parent=1 // pred_region
      %s37 = ssub.s32 1024, 1024
      %38 = vsyncadd [#allocation6], %s37
      %s39 = sshll.u32 [#allocation5], 4
      %s40 = int_to_ptr.vmem [resolvable:$true] %s39
      %45 = dma.hbm_to_vmem [thread:$0]  %s3, 1024, %s40, [#allocation6], 64, 64, 4
    $region17: #{tpu_custom_call.1} parent=1 // pred_fallthru
      _
    // Predicated region
    $region18: #{tpu_custom_call.1} parent=1 // pred_check
      _
    $region19: #{tpu_custom_call.1} parent=1 // pred_check_branch
      %47 = sbr.rel (0) target = $region21
    $region20: #{tpu_custom_call.1} parent=1 // pred_region
      _
    $region21: #{tpu_custom_call.1} parent=1 // pred_fallthru
      _
    // Predicated region
    $region22: #{tpu_custom_call.1} parent=1 // pred_check
      _
    $region23: #{tpu_custom_call.1} parent=1 // pred_check_branch
      %49 = sbr.rel (0) target = $region25
    $region24: #{tpu_custom_call.1} parent=1 // pred_region
      %s51 = ssub.s32 1024, 1024
      %52 = vsyncadd [#allocation6], %s51
      %s53 = sshll.u32 [#allocation7], 4
      %s54 = int_to_ptr.vmem [resolvable:$true] %s53
      %59 = dma.hbm_to_vmem [thread:$0]  %s5, 1024, %s54, [#allocation6], 64, 64, 4
    $region25: #{tpu_custom_call.1} parent=1 // pred_fallthru
      _
    // Predicated region
    $region26: #{tpu_custom_call.1} parent=1 // pred_check
      _
    $region27: #{tpu_custom_call.1} parent=1 // pred_check_branch
      %61 = sbr.rel (0) target = $region29
    $region28: #{tpu_custom_call.1} parent=1 // pred_region
      _
    $region29: #{tpu_custom_call.1} parent=1 // pred_fallthru
      _
    // Predicated region
    $region30: #{tpu_custom_call.1} parent=1 // pred_check
      _
    $region31: #{tpu_custom_call.1} parent=1 // pred_check_branch
      %63 = sbr.rel (0) target = $region33
    $region32: #{tpu_custom_call.1} parent=1 // pred_region
      %s65 = ssub.s32 1024, 1024
      %66 = vsyncadd [#allocation9], %s65
      %s67 = sshll.u32 [#allocation8], 4
      %s68 = int_to_ptr.vmem [resolvable:$true] %s67
      %73 = dma.hbm_to_vmem [thread:$0]  %s7, 1024, %s68, [#allocation9], 64, 64, 4
    $region33: #{tpu_custom_call.1} parent=1 // pred_fallthru
      _
    // Predicated region
    $region34: #{tpu_custom_call.1} parent=1 // pred_check
      _
    $region35: #{tpu_custom_call.1} parent=1 // pred_check_branch
      %75 = sbr.rel (0) target = $region37
    $region36: #{tpu_custom_call.1} parent=1 // pred_region
      _
    $region37: #{tpu_custom_call.1} parent=1 // pred_fallthru
      _
    // Predicated region
    $region38: #{tpu_custom_call.1} parent=1 // pred_check
      _
    $region39: #{tpu_custom_call.1} parent=1 // pred_check_branch
      %77 = sbr.rel (0) target = $region41
    $region40: #{tpu_custom_call.1} parent=1 // pred_region
      %78 = dma.done [#allocation3], 1024
    $region41: #{tpu_custom_call.1} parent=1 // pred_fallthru
      _
    // Predicated region
    $region42: #{tpu_custom_call.1} parent=1 // pred_check
      _
    $region43: #{tpu_custom_call.1} parent=1 // pred_check_branch
      %80 = sbr.rel (0) target = $region45
    $region44: #{tpu_custom_call.1} parent=1 // pred_region
      %81 = dma.done [#allocation6], 1024
    $region45: #{tpu_custom_call.1} parent=1 // pred_fallthru
      _
    // Predicated region
    $region46: #{tpu_custom_call.1} parent=1 // pred_check
      _
    $region47: #{tpu_custom_call.1} parent=1 // pred_check_branch
      %83 = sbr.rel (0) target = $region49
    $region48: #{tpu_custom_call.1} parent=1 // pred_region
      %84 = dma.done [#allocation6], 1024
    $region49: #{tpu_custom_call.1} parent=1 // pred_fallthru
      _
    // Predicated region
    $region50: #{tpu_custom_call.1} parent=1 // pred_check
      _
    $region51: #{tpu_custom_call.1} parent=1 // pred_check_branch
      %86 = sbr.rel (0) target = $region53
    $region52: #{tpu_custom_call.1} parent=1 // pred_region
      %87 = dma.done [#allocation9], 1024
    $region53: #{tpu_custom_call.1} parent=1 // pred_fallthru
      _
    %v89 = vld [vmem:[%s0] sm:$0xff]
    %v90 = vld [vmem:[%s0 + $0x8] sm:$0xff]
    %v91 = vlaneseq
    %v92 = vand.u32 %v91, 127
    %93 = vset.pattern.permute.xlu0 0
    %94 = vperm.xlu0 %93, %v89
    %v95 = vpop.permute.xlu0 %94
    %96 = vset.pattern.permute.xlu0 0
    %97 = vperm.xlu0 %96, %v90
    %v98 = vpop.permute.xlu0 %97
    %vm99 = vcmp.eq.s32.totalorder %v95, %v92
    %vm100 = vcmp.eq.s32.totalorder %v98, %v92
    %v101 = vsel %vm99, 1, 0
    %v102 = vsel %vm100, 1, 0
    %v103 = vcvt.s32.f32 %v101
    %v104 = vcvt.s32.f32 %v102
    %v105 = vadd.f32 %v103, 0.0
    %v106 = vadd.f32 %v104, 0.0
    %107 = vset.pattern.permute.xlu0 1
    %108 = vperm.xlu0 %107, %v89
    %v109 = vpop.permute.xlu0 %108
    %110 = vset.pattern.permute.xlu0 1
    %111 = vperm.xlu0 %110, %v90
    %v112 = vpop.permute.xlu0 %111
    %vm113 = vcmp.eq.s32.totalorder %v109, %v92
    %vm114 = vcmp.eq.s32.totalorder %v112, %v92
    %v115 = vsel %vm113, 1, 0
    %v116 = vsel %vm114, 1, 0
    %v117 = vcvt.s32.f32 %v115
    %v118 = vcvt.s32.f32 %v116
    %v119 = vadd.f32 %v105, %v117
    %v120 = vadd.f32 %v106, %v118
    %121 = vset.pattern.permute.xlu0 2
    %122 = vperm.xlu0 %121, %v89
    %v123 = vpop.permute.xlu0 %122
    %124 = vset.pattern.permute.xlu0 2
    %125 = vperm.xlu0 %124, %v90
    %v126 = vpop.permute.xlu0 %125
    %vm127 = vcmp.eq.s32.totalorder %v123, %v92
    %vm128 = vcmp.eq.s32.totalorder %v126, %v92
    %v129 = vsel %vm127, 1, 0
    %v130 = vsel %vm128, 1, 0
    %v131 = vcvt.s32.f32 %v129
    %v132 = vcvt.s32.f32 %v130
    %v133 = vadd.f32 %v119, %v131
    %v134 = vadd.f32 %v120, %v132
    %135 = vset.pattern.permute.xlu0 3
    %136 = vperm.xlu0 %135, %v89
    %v137 = vpop.permute.xlu0 %136
    %138 = vset.pattern.permute.xlu0 3
    %139 = vperm.xlu0 %138, %v90
    %v140 = vpop.permute.xlu0 %139
    %vm141 = vcmp.eq.s32.totalorder %v137, %v92
    %vm142 = vcmp.eq.s32.totalorder %v140, %v92
    %v143 = vsel %vm141, 1, 0
    %v144 = vsel %vm142, 1, 0
    %v145 = vcvt.s32.f32 %v143
    %v146 = vcvt.s32.f32 %v144
    %v147 = vadd.f32 %v133, %v145
    %v148 = vadd.f32 %v134, %v146
    %149 = vset.pattern.permute.xlu0 4
    %150 = vperm.xlu0 %149, %v89
    %v151 = vpop.permute.xlu0 %150
    %152 = vset.pattern.permute.xlu0 4
    %153 = vperm.xlu0 %152, %v90
    %v154 = vpop.permute.xlu0 %153
    %vm155 = vcmp.eq.s32.totalorder %v151, %v92
    %vm156 = vcmp.eq.s32.totalorder %v154, %v92
    %v157 = vsel %vm155, 1, 0
    %v158 = vsel %vm156, 1, 0
    %v159 = vcvt.s32.f32 %v157
    %v160 = vcvt.s32.f32 %v158
    %v161 = vadd.f32 %v147, %v159
    %v162 = vadd.f32 %v148, %v160
    %163 = vset.pattern.permute.xlu0 5
    %164 = vperm.xlu0 %163, %v89
    %v165 = vpop.permute.xlu0 %164
    %166 = vset.pattern.permute.xlu0 5
    %167 = vperm.xlu0 %166, %v90
    %v168 = vpop.permute.xlu0 %167
    %vm169 = vcmp.eq.s32.totalorder %v165, %v92
    %vm170 = vcmp.eq.s32.totalorder %v168, %v92
    %v171 = vsel %vm169, 1, 0
    %v172 = vsel %vm170, 1, 0
    %v173 = vcvt.s32.f32 %v171
    %v174 = vcvt.s32.f32 %v172
    %v175 = vadd.f32 %v161, %v173
    %v176 = vadd.f32 %v162, %v174
    %177 = vset.pattern.permute.xlu0 6
    %178 = vperm.xlu0 %177, %v89
    %v179 = vpop.permute.xlu0 %178
    %180 = vset.pattern.permute.xlu0 6
    %181 = vperm.xlu0 %180, %v90
    %v182 = vpop.permute.xlu0 %181
    %vm183 = vcmp.eq.s32.totalorder %v179, %v92
    %vm184 = vcmp.eq.s32.totalorder %v182, %v92
    %v185 = vsel %vm183, 1, 0
    %v186 = vsel %vm184, 1, 0
    %v187 = vcvt.s32.f32 %v185
    %v188 = vcvt.s32.f32 %v186
    %v189 = vadd.f32 %v175, %v187
    %v190 = vadd.f32 %v176, %v188
    %191 = vset.pattern.permute.xlu0 7
    %192 = vperm.xlu0 %191, %v89
    %v193 = vpop.permute.xlu0 %192
    %194 = vset.pattern.permute.xlu0 7
    %195 = vperm.xlu0 %194, %v90
    %v196 = vpop.permute.xlu0 %195
    %vm197 = vcmp.eq.s32.totalorder %v193, %v92
    %vm198 = vcmp.eq.s32.totalorder %v196, %v92
    %v199 = vsel %vm197, 1, 0
    %v200 = vsel %vm198, 1, 0
    %v201 = vcvt.s32.f32 %v199
    %v202 = vcvt.s32.f32 %v200
    %v203 = vadd.f32 %v189, %v201
    %v204 = vadd.f32 %v190, %v202
    %205 = vset.pattern.permute.xlu0 8
    %206 = vperm.xlu0 %205, %v89
    %v207 = vpop.permute.xlu0 %206
    %208 = vset.pattern.permute.xlu0 8
    %209 = vperm.xlu0 %208, %v90
    %v210 = vpop.permute.xlu0 %209
    %vm211 = vcmp.eq.s32.totalorder %v207, %v92
    %vm212 = vcmp.eq.s32.totalorder %v210, %v92
    %v213 = vsel %vm211, 1, 0
    %v214 = vsel %vm212, 1, 0
    %v215 = vcvt.s32.f32 %v213
    %v216 = vcvt.s32.f32 %v214
    %v217 = vadd.f32 %v203, %v215
    %v218 = vadd.f32 %v204, %v216
    %219 = vset.pattern.permute.xlu0 9
    %220 = vperm.xlu0 %219, %v89
    %v221 = vpop.permute.xlu0 %220
    %222 = vset.pattern.permute.xlu0 9
    %223 = vperm.xlu0 %222, %v90
    %v224 = vpop.permute.xlu0 %223
    %vm225 = vcmp.eq.s32.totalorder %v221, %v92
    %vm226 = vcmp.eq.s32.totalorder %v224, %v92
    %v227 = vsel %vm225, 1, 0
    %v228 = vsel %vm226, 1, 0
    %v229 = vcvt.s32.f32 %v227
    %v230 = vcvt.s32.f32 %v228
    %v231 = vadd.f32 %v217, %v229
    %v232 = vadd.f32 %v218, %v230
    %233 = vset.pattern.permute.xlu0 10
    %234 = vperm.xlu0 %233, %v89
    %v235 = vpop.permute.xlu0 %234
    %236 = vset.pattern.permute.xlu0 10
    %237 = vperm.xlu0 %236, %v90
    %v238 = vpop.permute.xlu0 %237
    %vm239 = vcmp.eq.s32.totalorder %v235, %v92
    %vm240 = vcmp.eq.s32.totalorder %v238, %v92
    %v241 = vsel %vm239, 1, 0
    %v242 = vsel %vm240, 1, 0
    %v243 = vcvt.s32.f32 %v241
    %v244 = vcvt.s32.f32 %v242
    %v245 = vadd.f32 %v231, %v243
    %v246 = vadd.f32 %v232, %v244
    %247 = vset.pattern.permute.xlu0 11
    %248 = vperm.xlu0 %247, %v89
    %v249 = vpop.permute.xlu0 %248
    %250 = vset.pattern.permute.xlu0 11
    %251 = vperm.xlu0 %250, %v90
    %v252 = vpop.permute.xlu0 %251
    %vm253 = vcmp.eq.s32.totalorder %v249, %v92
    %vm254 = vcmp.eq.s32.totalorder %v252, %v92
    %v255 = vsel %vm253, 1, 0
    %v256 = vsel %vm254, 1, 0
    %v257 = vcvt.s32.f32 %v255
    %v258 = vcvt.s32.f32 %v256
    %v259 = vadd.f32 %v245, %v257
    %v260 = vadd.f32 %v246, %v258
    %261 = vset.pattern.permute.xlu0 12
    %262 = vperm.xlu0 %261, %v89
    %v263 = vpop.permute.xlu0 %262
    %264 = vset.pattern.permute.xlu0 12
    %265 = vperm.xlu0 %264, %v90
    %v266 = vpop.permute.xlu0 %265
    %vm267 = vcmp.eq.s32.totalorder %v263, %v92
    %vm268 = vcmp.eq.s32.totalorder %v266, %v92
    %v269 = vsel %vm267, 1, 0
    %v270 = vsel %vm268, 1, 0
    %v271 = vcvt.s32.f32 %v269
    %v272 = vcvt.s32.f32 %v270
    %v273 = vadd.f32 %v259, %v271
    %v274 = vadd.f32 %v260, %v272
    %275 = vset.pattern.permute.xlu0 13
    %276 = vperm.xlu0 %275, %v89
    %v277 = vpop.permute.xlu0 %276
    %278 = vset.pattern.permute.xlu0 13
    %279 = vperm.xlu0 %278, %v90
    %v280 = vpop.permute.xlu0 %279
    %vm281 = vcmp.eq.s32.totalorder %v277, %v92
    %vm282 = vcmp.eq.s32.totalorder %v280, %v92
    %v283 = vsel %vm281, 1, 0
    %v284 = vsel %vm282, 1, 0
    %v285 = vcvt.s32.f32 %v283
    %v286 = vcvt.s32.f32 %v284
    %v287 = vadd.f32 %v273, %v285
    %v288 = vadd.f32 %v274, %v286
    %289 = vset.pattern.permute.xlu0 14
    %290 = vperm.xlu0 %289, %v89
    %v291 = vpop.permute.xlu0 %290
    %292 = vset.pattern.permute.xlu0 14
    %293 = vperm.xlu0 %292, %v90
    %v294 = vpop.permute.xlu0 %293
    %vm295 = vcmp.eq.s32.totalorder %v291, %v92
    %vm296 = vcmp.eq.s32.totalorder %v294, %v92
    %v297 = vsel %vm295, 1, 0
    %v298 = vsel %vm296, 1, 0
    %v299 = vcvt.s32.f32 %v297
    %v300 = vcvt.s32.f32 %v298
    %v301 = vadd.f32 %v287, %v299
    %v302 = vadd.f32 %v288, %v300
    %303 = vset.pattern.permute.xlu0 15
    %304 = vperm.xlu0 %303, %v89
    %v305 = vpop.permute.xlu0 %304
    %306 = vset.pattern.permute.xlu0 15
    %307 = vperm.xlu0 %306, %v90
    %v308 = vpop.permute.xlu0 %307
    %vm309 = vcmp.eq.s32.totalorder %v305, %v92
    %vm310 = vcmp.eq.s32.totalorder %v308, %v92
    %v311 = vsel %vm309, 1, 0
    %v312 = vsel %vm310, 1, 0
    %v313 = vcvt.s32.f32 %v311
    %v314 = vcvt.s32.f32 %v312
    %v315 = vadd.f32 %v301, %v313
    %v316 = vadd.f32 %v302, %v314
    %v317 = vpack.c.bf16 %v316, %v315
    %v318 = vld [vmem:[#allocation2] sm:$0xf]
    %v319 = vld [vmem:[#allocation2 + $0x4] sm:$0xf]
    %v320 = vld [vmem:[#allocation2 + $0x8] sm:$0xf]
    %v321 = vld [vmem:[#allocation2 + $0xc] sm:$0xf]
    %v322 = vld [vmem:[#allocation2 + $0x10] sm:$0xf]
    %v323 = vld [vmem:[#allocation2 + $0x14] sm:$0xf]
    %v324 = vld [vmem:[#allocation2 + $0x18] sm:$0xf]
    %v325 = vld [vmem:[#allocation2 + $0x1c] sm:$0xf]
    %v326 = vld [vmem:[#allocation2 + $0x20] sm:$0xf]
    %v327 = vld [vmem:[#allocation2 + $0x24] sm:$0xf]
    %v328 = vld [vmem:[#allocation2 + $0x28] sm:$0xf]
    %v329 = vld [vmem:[#allocation2 + $0x2c] sm:$0xf]
    %v330 = vld [vmem:[#allocation2 + $0x30] sm:$0xf]
    %v331 = vld [vmem:[#allocation2 + $0x34] sm:$0xf]
    %v332 = vld [vmem:[#allocation2 + $0x38] sm:$0xf]
    %v333 = vld [vmem:[#allocation2 + $0x3c] sm:$0xf]
    %v350 = vunpack.c.l.b16 %v318
    %v351 = vunpack.c.l.b16 %v319
    %v352 = vunpack.c.l.b16 %v320
    %v353 = vunpack.c.l.b16 %v321
    %v354 = vunpack.c.l.b16 %v322
    %v355 = vunpack.c.l.b16 %v323
    %v356 = vunpack.c.l.b16 %v324
    %v357 = vunpack.c.l.b16 %v325
    %v358 = vunpack.c.l.b16 %v326
    %v359 = vunpack.c.l.b16 %v327
    %v360 = vunpack.c.l.b16 %v328
    %v361 = vunpack.c.l.b16 %v329
    %v362 = vunpack.c.l.b16 %v330
    %v363 = vunpack.c.l.b16 %v331
    %v364 = vunpack.c.l.b16 %v332
    %v365 = vunpack.c.l.b16 %v333
    %v366 = vpack.c.b16 %v351, %v350
    %v367 = vpack.c.b16 %v353, %v352
    %v368 = vpack.c.b16 %v355, %v354
    %v369 = vpack.c.b16 %v357, %v356
    %v370 = vpack.c.b16 %v359, %v358
    %v371 = vpack.c.b16 %v361, %v360
    %v372 = vpack.c.b16 %v363, %v362
    %v373 = vpack.c.b16 %v365, %v364
    %382 = vmatprep.subr.bf16.mxu0 0
    %383 = vmatpush1.bf16.msra.mxu0 %v366
    %384 = vmatprep.subr.bf16.mxu0 0
    %385 = vmatpush1.bf16.msra.mxu0 %v367
    %386 = vmatprep.subr.bf16.mxu0 0
    %387 = vmatpush1.bf16.msra.mxu0 %v368
    %388 = vmatprep.subr.bf16.mxu0 0
    %389 = vmatpush1.bf16.msra.mxu0 %v369
    %390 = vmatprep.subr.bf16.mxu0 0
    %391 = vmatpush1.bf16.msra.mxu0 %v370
    %392 = vmatprep.subr.bf16.mxu0 0
    %393 = vmatpush1.bf16.msra.mxu0 %v371
    %394 = vmatprep.subr.bf16.mxu0 0
    %395 = vmatpush1.bf16.msra.mxu0 %v372
    %396 = vmatprep.subr.bf16.mxu0 0
    %397 = vmatpush1.bf16.msra.mxu0 %v373
    %398 = vmatprep.subr.bf16.mxu0 0
    %399 = vmatpush1.bf16.msra.mxu0 0
    %400 = vmatprep.subr.bf16.mxu0 0
    %401 = vmatpush1.bf16.msra.mxu0 0
    %402 = vmatprep.subr.bf16.mxu0 0
    %403 = vmatpush1.bf16.msra.mxu0 0
    %404 = vmatprep.subr.bf16.mxu0 0
    %405 = vmatpush1.bf16.msra.mxu0 0
    %406 = vmatprep.subr.bf16.mxu0 0
    %407 = vmatpush1.bf16.msra.mxu0 0
    %408 = vmatprep.subr.bf16.mxu0 0
    %409 = vmatpush1.bf16.msra.mxu0 0
    %410 = vmatprep.subr.bf16.mxu0 0
    %411 = vmatpush1.bf16.msra.mxu0 0
    %412 = vmatprep.subr.bf16.mxu0 0
    %413 = vmatpush1.bf16.msra.mxu0 0
    %414 = vmatprep.mubr.bf16.mxu0 0
    %415 = vmatmul.mubr.bf16.gmra.mrb[0].mxu0 %v317
    %v416 = vpop.f32.mrb[0].mxu0
    %v417 = vadd.f32 0.0, %v416
    %v418 = vpop.f32.mrb[0].mxu0
    %v419 = vpop.f32.mrb[0].mxu0
    %v420 = vadd.f32 0.0, %v419
    %v421 = vpop.f32.mrb[0].mxu0
    %422 = vdwg.mxu0
    %v423 = vld [vmem:[%s1] sm:$0xff]
    %v424 = vld [vmem:[%s1 + $0x8] sm:$0xff]
    %426 = vset.pattern.permute.xlu0 0
    %427 = vperm.xlu0 %426, %v423
    %v428 = vpop.permute.xlu0 %427
    %431 = vset.pattern.permute.xlu0 0
    %432 = vperm.xlu0 %431, %v424
    %v433 = vpop.permute.xlu0 %432
    %v435 = vmul.f32 %v417, %v428
    %v436 = vmul.f32 %v420, %v433
    %v437 = vld [vmem:[#allocation5] sm:$0xf]
    %v438 = vld [vmem:[#allocation5 + $0x4] sm:$0xf]
    %v439 = vld [vmem:[#allocation5 + $0x8] sm:$0xf]
    %v440 = vld [vmem:[#allocation5 + $0xc] sm:$0xf]
    %v441 = vld [vmem:[#allocation5 + $0x10] sm:$0xf]
    %v442 = vld [vmem:[#allocation5 + $0x14] sm:$0xf]
    %v443 = vld [vmem:[#allocation5 + $0x18] sm:$0xf]
    %v444 = vld [vmem:[#allocation5 + $0x1c] sm:$0xf]
    %v445 = vld [vmem:[#allocation5 + $0x20] sm:$0xf]
    %v446 = vld [vmem:[#allocation5 + $0x24] sm:$0xf]
    %v447 = vld [vmem:[#allocation5 + $0x28] sm:$0xf]
    %v448 = vld [vmem:[#allocation5 + $0x2c] sm:$0xf]
    %v449 = vld [vmem:[#allocation5 + $0x30] sm:$0xf]
    %v450 = vld [vmem:[#allocation5 + $0x34] sm:$0xf]
    %v451 = vld [vmem:[#allocation5 + $0x38] sm:$0xf]
    %v452 = vld [vmem:[#allocation5 + $0x3c] sm:$0xf]
    %v453 = vld [vmem:[%s4] sm:$0x1]
    %v454 = vpack.c.bf16 %v436, %v435
    %v456 = vlaneseq
    %v457 = vshrl.u32 %v456, 7
    %v458 = vsub.s32 0, %v457
    %v459 = vrot.slane %v453, %v458
    %v477 = vunpack.c.l.b16 %v437
    %v478 = vunpack.c.l.b16 %v438
    %v479 = vunpack.c.l.b16 %v439
    %v480 = vunpack.c.l.b16 %v440
    %v481 = vunpack.c.l.b16 %v441
    %v482 = vunpack.c.l.b16 %v442
    %v483 = vunpack.c.l.b16 %v443
    %v484 = vunpack.c.l.b16 %v444
    %v485 = vunpack.c.l.b16 %v445
    %v486 = vunpack.c.l.b16 %v446
    %v487 = vunpack.c.l.b16 %v447
    %v488 = vunpack.c.l.b16 %v448
    %v489 = vunpack.c.l.b16 %v449
    %v490 = vunpack.c.l.b16 %v450
    %v491 = vunpack.c.l.b16 %v451
    %v492 = vunpack.c.l.b16 %v452
    %v493 = vpack.c.b16 %v478, %v477
    %v494 = vpack.c.b16 %v480, %v479
    %v495 = vpack.c.b16 %v482, %v481
    %v496 = vpack.c.b16 %v484, %v483
    %v497 = vpack.c.b16 %v486, %v485
    %v498 = vpack.c.b16 %v488, %v487
    %v499 = vpack.c.b16 %v490, %v489
    %v500 = vpack.c.b16 %v492, %v491
    %509 = vmatprep.subr.bf16.mxu0 0
    %510 = vmatpush1.bf16.msra.mxu0 %v493
    %511 = vmatprep.subr.bf16.mxu0 0
    %512 = vmatpush1.bf16.msra.mxu0 %v494
    %513 = vmatprep.subr.bf16.mxu0 0
    %514 = vmatpush1.bf16.msra.mxu0 %v495
    %515 = vmatprep.subr.bf16.mxu0 0
    %516 = vmatpush1.bf16.msra.mxu0 %v496
    %517 = vmatprep.subr.bf16.mxu0 0
    %518 = vmatpush1.bf16.msra.mxu0 %v497
    %519 = vmatprep.subr.bf16.mxu0 0
    %520 = vmatpush1.bf16.msra.mxu0 %v498
    %521 = vmatprep.subr.bf16.mxu0 0
    %522 = vmatpush1.bf16.msra.mxu0 %v499
    %523 = vmatprep.subr.bf16.mxu0 0
    %524 = vmatpush1.bf16.msra.mxu0 %v500
    %525 = vmatprep.subr.bf16.mxu0 0
    %526 = vmatpush1.bf16.msra.mxu0 0
    %527 = vmatprep.subr.bf16.mxu0 0
    %528 = vmatpush1.bf16.msra.mxu0 0
    %529 = vmatprep.subr.bf16.mxu0 0
    %530 = vmatpush1.bf16.msra.mxu0 0
    %531 = vmatprep.subr.bf16.mxu0 0
    %532 = vmatpush1.bf16.msra.mxu0 0
    %533 = vmatprep.subr.bf16.mxu0 0
    %534 = vmatpush1.bf16.msra.mxu0 0
    %535 = vmatprep.subr.bf16.mxu0 0
    %536 = vmatpush1.bf16.msra.mxu0 0
    %537 = vmatprep.subr.bf16.mxu0 0
    %538 = vmatpush1.bf16.msra.mxu0 0
    %539 = vmatprep.subr.bf16.mxu0 0
    %540 = vmatpush1.bf16.msra.mxu0 0
    %541 = vmatprep.mubr.bf16.mxu0 0
    %542 = vmatmul.mubr.bf16.gmra.mrb[0].mxu0 %v454
    %v543 = vpop.f32.mrb[0].mxu0
    %v544 = vadd.f32 %v459, %v543
    %v545 = vpop.f32.mrb[0].mxu0
    %v546 = vpop.f32.mrb[0].mxu0
    %v547 = vadd.f32 %v459, %v546
    %v548 = vpop.f32.mrb[0].mxu0
    %549 = vdwg.mxu0
    %vm550 = vcmp.gt.f32.partialorder %v544, 0.0
    %vm551 = vcmp.gt.f32.partialorder %v547, 0.0
    %v552 = vmin.f32 %v544, 0.0
    %v553 = vmin.f32 %v547, 0.0
    %v554 = vmul.f32 %v552, 1.442695
    %v555 = vpow.pop %v554
    %v556 = vmul.f32 %v553, 1.442695
    %v557 = vpow.pop %v556
    %v558 = vsub.f32 %v555, 1.0
    %v559 = vsub.f32 %v557, 1.0
    %v560 = vsel %vm550, %v544, %v558
    %v561 = vsel %vm551, %v547, %v559
    %v562 = vld [vmem:[#allocation7] sm:$0xf]
    %v563 = vld [vmem:[#allocation7 + $0x4] sm:$0xf]
    %v564 = vld [vmem:[#allocation7 + $0x8] sm:$0xf]
    %v565 = vld [vmem:[#allocation7 + $0xc] sm:$0xf]
    %v566 = vld [vmem:[#allocation7 + $0x10] sm:$0xf]
    %v567 = vld [vmem:[#allocation7 + $0x14] sm:$0xf]
    %v568 = vld [vmem:[#allocation7 + $0x18] sm:$0xf]
    %v569 = vld [vmem:[#allocation7 + $0x1c] sm:$0xf]
    %v570 = vld [vmem:[#allocation7 + $0x20] sm:$0xf]
    %v571 = vld [vmem:[#allocation7 + $0x24] sm:$0xf]
    %v572 = vld [vmem:[#allocation7 + $0x28] sm:$0xf]
    %v573 = vld [vmem:[#allocation7 + $0x2c] sm:$0xf]
    %v574 = vld [vmem:[#allocation7 + $0x30] sm:$0xf]
    %v575 = vld [vmem:[#allocation7 + $0x34] sm:$0xf]
    %v576 = vld [vmem:[#allocation7 + $0x38] sm:$0xf]
    %v577 = vld [vmem:[#allocation7 + $0x3c] sm:$0xf]
    %v578 = vld [vmem:[%s6] sm:$0x1]
    %v579 = vpack.c.bf16 %v561, %v560
    %v581 = vlaneseq
    %v582 = vshrl.u32 %v581, 7
    %v583 = vsub.s32 0, %v582
    %v584 = vrot.slane %v578, %v583
    %v602 = vunpack.c.l.b16 %v562
    %v603 = vunpack.c.l.b16 %v563
    %v604 = vunpack.c.l.b16 %v564
    %v605 = vunpack.c.l.b16 %v565
    %v606 = vunpack.c.l.b16 %v566
    %v607 = vunpack.c.l.b16 %v567
    %v608 = vunpack.c.l.b16 %v568
    %v609 = vunpack.c.l.b16 %v569
    %v610 = vunpack.c.l.b16 %v570
    %v611 = vunpack.c.l.b16 %v571
    %v612 = vunpack.c.l.b16 %v572
    %v613 = vunpack.c.l.b16 %v573
    %v614 = vunpack.c.l.b16 %v574
    %v615 = vunpack.c.l.b16 %v575
    %v616 = vunpack.c.l.b16 %v576
    %v617 = vunpack.c.l.b16 %v577
    %v618 = vpack.c.b16 %v603, %v602
    %v619 = vpack.c.b16 %v605, %v604
    %v620 = vpack.c.b16 %v607, %v606
    %v621 = vpack.c.b16 %v609, %v608
    %v622 = vpack.c.b16 %v611, %v610
    %v623 = vpack.c.b16 %v613, %v612
    %v624 = vpack.c.b16 %v615, %v614
    %v625 = vpack.c.b16 %v617, %v616
    %634 = vmatprep.subr.bf16.mxu0 0
    %635 = vmatpush1.bf16.msra.mxu0 %v618
    %636 = vmatprep.subr.bf16.mxu0 0
    %637 = vmatpush1.bf16.msra.mxu0 %v619
    %638 = vmatprep.subr.bf16.mxu0 0
    %639 = vmatpush1.bf16.msra.mxu0 %v620
    %640 = vmatprep.subr.bf16.mxu0 0
    %641 = vmatpush1.bf16.msra.mxu0 %v621
    %642 = vmatprep.subr.bf16.mxu0 0
    %643 = vmatpush1.bf16.msra.mxu0 %v622
    %644 = vmatprep.subr.bf16.mxu0 0
    %645 = vmatpush1.bf16.msra.mxu0 %v623
    %646 = vmatprep.subr.bf16.mxu0 0
    %647 = vmatpush1.bf16.msra.mxu0 %v624
    %648 = vmatprep.subr.bf16.mxu0 0
    %649 = vmatpush1.bf16.msra.mxu0 %v625
    %650 = vmatprep.subr.bf16.mxu0 0
    %651 = vmatpush1.bf16.msra.mxu0 0
    %652 = vmatprep.subr.bf16.mxu0 0
    %653 = vmatpush1.bf16.msra.mxu0 0
    %654 = vmatprep.subr.bf16.mxu0 0
    %655 = vmatpush1.bf16.msra.mxu0 0
    %656 = vmatprep.subr.bf16.mxu0 0
    %657 = vmatpush1.bf16.msra.mxu0 0
    %658 = vmatprep.subr.bf16.mxu0 0
    %659 = vmatpush1.bf16.msra.mxu0 0
    %660 = vmatprep.subr.bf16.mxu0 0
    %661 = vmatpush1.bf16.msra.mxu0 0
    %662 = vmatprep.subr.bf16.mxu0 0
    %663 = vmatpush1.bf16.msra.mxu0 0
    %664 = vmatprep.subr.bf16.mxu0 0
    %665 = vmatpush1.bf16.msra.mxu0 0
    %666 = vmatprep.mubr.bf16.mxu0 0
    %667 = vmatmul.mubr.bf16.gmra.mrb[0].mxu0 %v579
    %v668 = vpop.f32.mrb[0].mxu0
    %v669 = vadd.f32 %v584, %v668
    %v670 = vpop.f32.mrb[0].mxu0
    %v671 = vpop.f32.mrb[0].mxu0
    %v672 = vadd.f32 %v584, %v671
    %v673 = vpop.f32.mrb[0].mxu0
    %674 = vdwg.mxu0
    %vm675 = vcmp.gt.f32.partialorder %v669, 0.0
    %vm676 = vcmp.gt.f32.partialorder %v672, 0.0
    %v677 = vmin.f32 %v669, 0.0
    %v678 = vmin.f32 %v672, 0.0
    %v679 = vmul.f32 %v677, 1.442695
    %v680 = vpow.pop %v679
    %v681 = vmul.f32 %v678, 1.442695
    %v682 = vpow.pop %v681
    %v683 = vsub.f32 %v680, 1.0
    %v684 = vsub.f32 %v682, 1.0
    %v685 = vsel %vm675, %v669, %v683
    %v686 = vsel %vm676, %v672, %v684
    %v687 = vld [vmem:[#allocation8] sm:$0xf]
    %v688 = vld [vmem:[#allocation8 + $0x4] sm:$0xf]
    %v689 = vld [vmem:[#allocation8 + $0x8] sm:$0xf]
    %v690 = vld [vmem:[#allocation8 + $0xc] sm:$0xf]
    %v691 = vld [vmem:[#allocation8 + $0x10] sm:$0xf]
    %v692 = vld [vmem:[#allocation8 + $0x14] sm:$0xf]
    %v693 = vld [vmem:[#allocation8 + $0x18] sm:$0xf]
    %v694 = vld [vmem:[#allocation8 + $0x1c] sm:$0xf]
    %v695 = vld [vmem:[#allocation8 + $0x20] sm:$0xf]
    %v696 = vld [vmem:[#allocation8 + $0x24] sm:$0xf]
    %v697 = vld [vmem:[#allocation8 + $0x28] sm:$0xf]
    %v698 = vld [vmem:[#allocation8 + $0x2c] sm:$0xf]
    %v699 = vld [vmem:[#allocation8 + $0x30] sm:$0xf]
    %v700 = vld [vmem:[#allocation8 + $0x34] sm:$0xf]
    %v701 = vld [vmem:[#allocation8 + $0x38] sm:$0xf]
    %v702 = vld [vmem:[#allocation8 + $0x3c] sm:$0xf]
    %v703 = vld [vmem:[%s8] sm:$0x1]
    %v704 = vpack.c.bf16 %v686, %v685
    %v706 = vlaneseq
    %v707 = vshrl.u32 %v706, 7
    %v708 = vsub.s32 0, %v707
    %v709 = vrot.slane %v703, %v708
    %v727 = vunpack.c.l.b16 %v687
    %v728 = vunpack.c.l.b16 %v688
    %v729 = vunpack.c.l.b16 %v689
    %v730 = vunpack.c.l.b16 %v690
    %v731 = vunpack.c.l.b16 %v691
    %v732 = vunpack.c.l.b16 %v692
    %v733 = vunpack.c.l.b16 %v693
    %v734 = vunpack.c.l.b16 %v694
    %v735 = vunpack.c.l.b16 %v695
    %v736 = vunpack.c.l.b16 %v696
    %v737 = vunpack.c.l.b16 %v697
    %v738 = vunpack.c.l.b16 %v698
    %v739 = vunpack.c.l.b16 %v699
    %v740 = vunpack.c.l.b16 %v700
    %v741 = vunpack.c.l.b16 %v701
    %v742 = vunpack.c.l.b16 %v702
    %v743 = vpack.c.b16 %v728, %v727
    %v744 = vpack.c.b16 %v730, %v729
    %v745 = vpack.c.b16 %v732, %v731
    %v746 = vpack.c.b16 %v734, %v733
    %v747 = vpack.c.b16 %v736, %v735
    %v748 = vpack.c.b16 %v738, %v737
    %v749 = vpack.c.b16 %v740, %v739
    %v750 = vpack.c.b16 %v742, %v741
    %759 = vmatprep.subr.bf16.mxu0 0
    %760 = vmatpush1.bf16.msra.mxu0 %v743
    %761 = vmatprep.subr.bf16.mxu0 0
    %762 = vmatpush1.bf16.msra.mxu0 %v744
    %763 = vmatprep.subr.bf16.mxu0 0
    %764 = vmatpush1.bf16.msra.mxu0 %v745
    %765 = vmatprep.subr.bf16.mxu0 0
    %766 = vmatpush1.bf16.msra.mxu0 %v746
    %767 = vmatprep.subr.bf16.mxu0 0
    %768 = vmatpush1.bf16.msra.mxu0 %v747
    %769 = vmatprep.subr.bf16.mxu0 0
    %770 = vmatpush1.bf16.msra.mxu0 %v748
    %771 = vmatprep.subr.bf16.mxu0 0
    %772 = vmatpush1.bf16.msra.mxu0 %v749
    %773 = vmatprep.subr.bf16.mxu0 0
    %774 = vmatpush1.bf16.msra.mxu0 %v750
    %775 = vmatprep.subr.bf16.mxu0 0
    %776 = vmatpush1.bf16.msra.mxu0 0
    %777 = vmatprep.subr.bf16.mxu0 0
    %778 = vmatpush1.bf16.msra.mxu0 0
    %779 = vmatprep.subr.bf16.mxu0 0
    %780 = vmatpush1.bf16.msra.mxu0 0
    %781 = vmatprep.subr.bf16.mxu0 0
    %782 = vmatpush1.bf16.msra.mxu0 0
    %783 = vmatprep.subr.bf16.mxu0 0
    %784 = vmatpush1.bf16.msra.mxu0 0
    %785 = vmatprep.subr.bf16.mxu0 0
    %786 = vmatpush1.bf16.msra.mxu0 0
    %787 = vmatprep.subr.bf16.mxu0 0
    %788 = vmatpush1.bf16.msra.mxu0 0
    %789 = vmatprep.subr.bf16.mxu0 0
    %790 = vmatpush1.bf16.msra.mxu0 0
    %791 = vmatprep.mubr.bf16.mxu0 0
    %792 = vmatmul.mubr.bf16.gmra.mrb[0].mxu0 %v704
    %v793 = vpop.f32.mrb[0].mxu0
    %v794 = vadd.f32 %v709, %v793
    %v795 = vpop.f32.mrb[0].mxu0
    %v796 = vpop.f32.mrb[0].mxu0
    %v797 = vadd.f32 %v709, %v796
    %v798 = vpop.f32.mrb[0].mxu0
    %799 = vdwg.mxu0
    %800 = vst [vmem:[#allocation10] sm:$0xff] %v794
    %801 = vst [vmem:[#allocation10 + $0x8] sm:$0xff] %v797
    // Predicated region
    $region54: #{tpu_custom_call.1} parent=1 // pred_check
      _
    $region55: #{tpu_custom_call.1} parent=1 // pred_check_branch
      %803 = sbr.rel (0) target = $region57
    $region56: #{tpu_custom_call.1} parent=1 // pred_region
      %s805 = ssub.s32 256, 256
      %806 = vsyncadd [#allocation4], %s805
      %s807 = sshll.u32 [#allocation10], 4
      %s808 = int_to_ptr.vmem [resolvable:$true] %s807
      %813 = dma.vmem_to_hbm [thread:$0]  %s808, 256, %s9, [#allocation4], 128, 128, 8
    $region57: #{tpu_custom_call.1} parent=1 // pred_fallthru
      _
    // Predicated region
    $region58: #{tpu_custom_call.1} parent=1 // pred_check
      _
    $region59: #{tpu_custom_call.1} parent=1 // pred_check_branch
      %815 = sbr.rel (0) target = $region61
    $region60: #{tpu_custom_call.1} parent=1 // pred_region
      %816 = dma.done [#allocation4], 256
    $region61: #{tpu_custom_call.1} parent=1 // pred_fallthru
      _
    %817 = vsyncpa [#allocation3], 1
    %818 = vsyncpa [#allocation6], 1
    %819 = vsyncpa [#allocation9], 1
    %820 = vsyncpa [#allocation4], 1

</llo_original>
